<compile_context>
chip_gen: v5e
topology: v5e:2x2
jax: 0.10.0
libtpu: 0.0.40
codegen_flags: <defaults>
</compile_context>

<pallas_src>
from typing import Dict, Iterable, Optional

import jax
import jax.numpy as jnp
from jax.experimental import pallas as pl
from jax.experimental.pallas import tpu as pltpu

_LANE = 128                               # TPU lane width
_MAX_TILE_ROWS = 2048                     # rows of 128 lanes per grid step (cap)
_VMEM_BUDGET_BYTES = 16 * 1024 * 1024     # double-buffered pipeline budget (v7x-safe)
_MIN_PALLAS_ELEMS = 8 * _LANE             # below this, plain jnp is strictly faster


# ----------------------------- Pallas kernels ------------------------------ #

def _weighted_sum_kernel(w_ref, *refs):
    # w_ref: (T,) f32 in SMEM; refs = (loss_ref_0..loss_ref_{T-1}, out_ref),
    # each loss/out block is (TILE_R, 128). Pure VPU multiply-add in f32.
    *loss_refs, out_ref = refs
    acc = loss_refs[0][...].astype(jnp.float32) * w_ref[0]
    for t in range(1, len(loss_refs)):
        acc = acc + loss_refs[t][...].astype(jnp.float32) * w_ref[t]
    out_ref[...] = acc.astype(out_ref.dtype)


def _sum_kernel(*refs):
    # refs = (loss_ref_0..loss_ref_{T-1}, out_ref); plain sum (naive method).
    *loss_refs, out_ref = refs
    acc = loss_refs[0][...].astype(jnp.float32)
    for r in loss_refs[1:]:
        acc = acc + r[...].astype(jnp.float32)
    out_ref[...] = acc.astype(out_ref.dtype)


# ----------------------------- Pallas wrappers ------------------------------ #

def _pick_tile_rows(total_rows: int, n_streams: int) -> int:
    """Largest multiple-of-8 row tile whose double-buffered footprint fits budget."""
    per_row_bytes = 2 * n_streams * _LANE * 4     # 2 buffers, all streams, f32
    rows = _VMEM_BUDGET_BYTES // per_row_bytes
    rows = min(rows, _MAX_TILE_ROWS, total_rows)
    rows = max(8, (rows // 8) * 8)
    return int(rows)


def _pallas_combine(flat_losses, weights, out_dtype):
    """Weighted (or plain) sum of T flat, 128-aligned loss vectors via one
    pipelined pallas_call.  flat_losses: list of (N,) arrays, N % 128 == 0."""
    n = flat_losses[0].shape[0]
    rows = n // _LANE
    t = len(flat_losses)
    tile_rows = _pick_tile_rows(rows, t + 1)

    # (N,) -> (rows, 128) is a free, layout-preserving reshape (no HBM copy).
    mats = [f.reshape(rows, _LANE) for f in flat_losses]

    loss_spec = pl.BlockSpec((tile_rows, _LANE), lambda j: (j, 0))
    out_spec = pl.BlockSpec((tile_rows, _LANE), lambda j: (j, 0))
    grid = (pl.cdiv(rows, tile_rows),)

    if weights is None:
        kernel = _sum_kernel
        in_specs = [loss_spec] * t
        args = list(mats)
    else:
        kernel = _weighted_sum_kernel
        in_specs = [pl.BlockSpec(memory_space=pltpu.MemorySpace.SMEM)] + [loss_spec] * t
        args = [weights.astype(jnp.float32)] + list(mats)

    out = pl.pallas_call(
        kernel,
        out_shape=jax.ShapeDtypeStruct((rows, _LANE), out_dtype),
        grid=grid,
        in_specs=in_specs,
        out_specs=out_spec,
        compiler_params=pltpu.CompilerParams(
            dimension_semantics=("parallel",),   # lets v7x shard tiles over its 2 TCs
        ),
    )(*args)
    return out.reshape(n)


def _jnp_combine(losses, weights):
    """Plain-jnp fallback for tiny / lane-unaligned / broadcasting loss dicts."""
    if weights is None:
        out = losses[0]
        for l in losses[1:]:
            out = out + l
        return out
    out = losses[0] * weights[0]
    for i in range(1, len(losses)):
        out = out + losses[i] * weights[i]
    return out


# ----------------------------- Module wrapper ------------------------------ #

class MTL:
    """JAX/Pallas port of the PyTorch MTL module (forward-pass semantics)."""

    def __init__(self, num_tasks: int, method: Optional[str] = None):
        self._n_task, self._method = num_tasks, method
        if method is None or method == "naive":
            pass
        elif method == "softmax":
            # torch.nn.Parameter(torch.ones(num_tasks)) -> deterministic ones
            self.w = jnp.ones((num_tasks,), dtype=jnp.float32)
        else:
            raise NotImplementedError(f"MTL method '{method}' not implemented")
        self._slice, self.registered, self._registered = None, False, {}

    def register(self, names: Iterable[str]) -> None:
        if self.registered:
            raise ValueError("re-register is not permitted")
        names = list(names)
        self._rev_registered = {}
        for name in sorted(names):
            idx = len(self._registered)
            self._registered[name], self._rev_registered[idx] = idx, name
        # faithful to the original: slice counts the provided names
        self._slice, self.registered = len(names), True
        if self._slice > self._n_task:
            raise ValueError("registered names are more than n_task")

    def __call__(self, loss_dict: Dict[str, jax.Array], naive: bool = False) -> jax.Array:
        if not self.registered:
            raise ValueError("losses need to be registered")
        if naive or self._method is None:
            return self._naive(loss_dict)
        return getattr(self, f"_{self._method}")(loss_dict)

    # sum(loss_dict.values())
    def _naive(self, loss_dict: Dict[str, jax.Array]) -> jax.Array:
        losses = [jnp.asarray(l) for l in loss_dict.values()]
        out_dtype = jnp.result_type(*losses)
        return self._combine(losses, None, out_dtype)

    # sum_k loss_k * softmax(w)[idx_k] * slice   (unregistered: weight = slice)
    def _softmax(self, loss_dict: Dict[str, jax.Array]) -> jax.Array:
        w = self.w if self._slice == self._n_task else self.w[: self._slice]
        # Hoisted out of the kernel: T scalars; also folds the `* slice` factor.
        sw = jax.nn.softmax(w.astype(jnp.float32), axis=0) * jnp.float32(self._slice)

        losses, weights = [], []
        for key, loss in loss_dict.items():
            idx = self._registered.get(key)
            losses.append(jnp.asarray(loss))
            weights.append(sw[idx] if idx is not None else jnp.float32(self._slice))
        weights = jnp.stack(weights)                    # (num_present_losses,)
        out_dtype = jnp.result_type(jnp.float32, *losses)
        return self._combine(losses, weights, out_dtype)

    def _combine(self, losses, weights, out_dtype):
        shape0 = losses[0].shape
        same_shape = all(l.shape == shape0 for l in losses)
        n = int(losses[0].size)
        if same_shape and n >= _MIN_PALLAS_ELEMS and n % _LANE == 0:
            flats = [l.reshape(-1) for l in losses]     # free reshapes, no HBM copy
            out = _pallas_combine(flats, weights, out_dtype)
            return out.reshape(shape0)
        # TODO(synk): tiny / lane-unaligned / broadcasting loss dicts use the
        # fused XLA path instead of pallas (a kernel launch there is pure overhead).
        return _jnp_combine(losses, weights)


# --------------------------------- demo ------------------------------------ #

if __name__ == "__main__":
    key = jax.random.PRNGKey(0)
    keys = jax.random.split(key, 8)

    # ---- test 1: softmax path, small per-element losses (pallas path) ------
    num_tasks = 4
    names = ["task_a", "task_b", "task_c", "task_d"]
    shape = (8, 4, 16, 16)                                # 8192 elements
    loss_dict = {
        name: jax.random.uniform(k, shape, dtype=jnp.float32)
        for name, k in zip(names, keys[:num_tasks])
    }

    mtl = MTL(num_tasks, method="softmax")
    mtl.register(names)
    out_sm = jax.block_until_ready(mtl(loss_dict))
    sw = jax.nn.softmax(mtl.w)
    ref_sm = sum(loss_dict[n] * sw[mtl._registered[n]] for n in names) * mtl._slice
    assert out_sm.shape == shape
    assert jnp.allclose(out_sm, ref_sm, atol=1e-5, rtol=1e-5)

    # ---- test 2: naive path, same losses (pallas path) ----------------------
    mtl_naive = MTL(num_tasks, method=None)
    mtl_naive.register(names)
    out_nv = jax.block_until_ready(mtl_naive(loss_dict))
    ref_nv = sum(loss_dict.values())
    assert jnp.allclose(out_nv, ref_nv, atol=1e-5, rtol=1e-5)

    # ---- test 3: softmax path, larger losses -> multi-step grid with a
    #      partial last tile, plus a missing registered task and an extra
    #      unregistered loss --------------------------------------------------
    mtl_big = MTL(4, method="softmax")
    mtl_big.register(["a", "b", "c"])                     # slice = 3, "b" absent
    big_shape = (2500, 128)                               # 2500 rows -> multi-tile grid
    big_losses = {
        "a": jax.random.uniform(keys[4], big_shape, dtype=jnp.float32),
        "c": jax.random.uniform(keys[5], big_shape, dtype=jnp.float32),
        "extra": jax.random.uniform(keys[6], big_shape, dtype=jnp.float32),
    }
    out_big = jax.block_until_ready(mtl_big(big_losses))
    sw_big = jax.nn.softmax(mtl_big.w[: mtl_big._slice])
    ref_big = (big_losses["a"] * sw_big[0]
               + big_losses["c"] * sw_big[2]
               + big_losses["extra"]) * mtl_big._slice
    assert out_big.shape == big_shape
    assert jnp.allclose(out_big, ref_big, atol=1e-5, rtol=1e-5)

    # ---- test 4: mixed-precision losses through the pallas path -------------
    mtl_mix = MTL(2, method="softmax")
    mtl_mix.register(["x", "y"])
    mix_losses = {
        "x": jax.random.uniform(keys[7], shape, dtype=jnp.float32).astype(jnp.bfloat16),
        "y": jax.random.uniform(keys[3], shape, dtype=jnp.float32),
    }
    out_mix = jax.block_until_ready(mtl_mix(mix_losses))
    sw_mix = jax.nn.softmax(mtl_mix.w)
    ref_mix = (mix_losses["x"].astype(jnp.float32) * sw_mix[0]
               + mix_losses["y"] * sw_mix[1]) * mtl_mix._slice
    assert out_mix.dtype == jnp.float32
    assert jnp.allclose(out_mix, ref_mix, atol=1e-2, rtol=1e-2)

    # ---- test 5: tiny scalar losses -> plain-jnp fallback --------------------
    mtl_small = MTL(2, method=None)
    mtl_small.register(["task_a", "task_b"])
    out_small = jax.block_until_ready(
        mtl_small({"task_a": jnp.float32(0.5), "task_b": jnp.float32(1.25)})
    )
    assert jnp.allclose(out_small, jnp.float32(1.75))

    print("KERNEL_OK")
</pallas_src>

<mosaic_0001>
module attributes {stable_mosaic.version = 11 : i64} {
  func.func @_weighted_sum_kernel(%arg0: i32, %arg1: memref<4xf32, #tpu.memory_space<smem>>, %arg2: memref<64x128xf32, #tpu.memory_space<vmem>>, %arg3: memref<64x128xf32, #tpu.memory_space<vmem>>, %arg4: memref<64x128xf32, #tpu.memory_space<vmem>>, %arg5: memref<64x128xf32, #tpu.memory_space<vmem>>, %arg6: memref<64x128xf32, #tpu.memory_space<vmem>>) attributes {dimension_semantics = [#tpu.dimension_semantics<parallel>], iteration_bounds = array<i64: 1>, scalar_prefetch = 0 : i64, scratch_operands = 0 : i64, tpu.core_type = #tpu.core_type<tc>, window_params = [{transform_indices = @transform_0, window_bounds = array<i64: 4>}, {transform_indices = @transform_1, window_bounds = array<i64: 64, 128>}, {transform_indices = @transform_2, window_bounds = array<i64: 64, 128>}, {transform_indices = @transform_3, window_bounds = array<i64: 64, 128>}, {transform_indices = @transform_4, window_bounds = array<i64: 64, 128>}, {transform_indices = @transform_5, window_bounds = array<i64: 64, 128>}]} {
    %c0 = arith.constant 0 : index
    %c0_0 = arith.constant 0 : index
    %0 = vector.load %arg2[%c0, %c0_0] : memref<64x128xf32, #tpu.memory_space<vmem>>, vector<64x128xf32>
    %c0_1 = arith.constant 0 : index
    %1 = memref.load %arg1[%c0_1] : memref<4xf32, #tpu.memory_space<smem>>
    %2 = vector.broadcast %1 : f32 to vector<64x128xf32>
    %3 = arith.mulf %0, %2 : vector<64x128xf32>
    %c0_2 = arith.constant 0 : index
    %c0_3 = arith.constant 0 : index
    %4 = vector.load %arg3[%c0_2, %c0_3] : memref<64x128xf32, #tpu.memory_space<vmem>>, vector<64x128xf32>
    %c1 = arith.constant 1 : index
    %5 = memref.load %arg1[%c1] : memref<4xf32, #tpu.memory_space<smem>>
    %6 = vector.broadcast %5 : f32 to vector<64x128xf32>
    %7 = arith.mulf %4, %6 : vector<64x128xf32>
    %8 = arith.addf %3, %7 : vector<64x128xf32>
    %c0_4 = arith.constant 0 : index
    %c0_5 = arith.constant 0 : index
    %9 = vector.load %arg4[%c0_4, %c0_5] : memref<64x128xf32, #tpu.memory_space<vmem>>, vector<64x128xf32>
    %c2 = arith.constant 2 : index
    %10 = memref.load %arg1[%c2] : memref<4xf32, #tpu.memory_space<smem>>
    %11 = vector.broadcast %10 : f32 to vector<64x128xf32>
    %12 = arith.mulf %9, %11 : vector<64x128xf32>
    %13 = arith.addf %8, %12 : vector<64x128xf32>
    %c0_6 = arith.constant 0 : index
    %c0_7 = arith.constant 0 : index
    %14 = vector.load %arg5[%c0_6, %c0_7] : memref<64x128xf32, #tpu.memory_space<vmem>>, vector<64x128xf32>
    %c3 = arith.constant 3 : index
    %15 = memref.load %arg1[%c3] : memref<4xf32, #tpu.memory_space<smem>>
    %16 = vector.broadcast %15 : f32 to vector<64x128xf32>
    %17 = arith.mulf %14, %16 : vector<64x128xf32>
    %18 = arith.addf %13, %17 : vector<64x128xf32>
    %c0_8 = arith.constant 0 : index
    %c0_9 = arith.constant 0 : index
    %19 = vector.load %arg6[%c0_8, %c0_9] : memref<64x128xf32, #tpu.memory_space<vmem>>, vector<64x128xf32>
    tpu.vector_store %arg6[%c0_8, %c0_9], %18 {strides = array<i32>} : memref<64x128xf32, #tpu.memory_space<vmem>>, vector<64x128xf32>,
    return
  }
  func.func @transform_0(%arg0: i32) -> i32 {
    %c0_i32 = arith.constant 0 : i32
    %c0_i32_0 = arith.constant 0 : i32
    return %c0_i32 : i32
  }
  func.func @transform_1(%arg0: i32) -> (i32, i32) {
    %c0_i32 = arith.constant 0 : i32
    %c0_i32_0 = arith.constant 0 : i32
    return %arg0, %c0_i32 : i32, i32
  }
  func.func @transform_2(%arg0: i32) -> (i32, i32) {
    %c0_i32 = arith.constant 0 : i32
    %c0_i32_0 = arith.constant 0 : i32
    return %arg0, %c0_i32 : i32, i32
  }
  func.func @transform_3(%arg0: i32) -> (i32, i32) {
    %c0_i32 = arith.constant 0 : i32
    %c0_i32_0 = arith.constant 0 : i32
    return %arg0, %c0_i32 : i32, i32
  }
  func.func @transform_4(%arg0: i32) -> (i32, i32) {
    %c0_i32 = arith.constant 0 : i32
    %c0_i32_0 = arith.constant 0 : i32
    return %arg0, %c0_i32 : i32, i32
  }
  func.func @transform_5(%arg0: i32) -> (i32, i32) {
    %c0_i32 = arith.constant 0 : i32
    %c0_i32_0 = arith.constant 0 : i32
    return %arg0, %c0_i32 : i32, i32
  }
}

</mosaic_0001>

<llo_original>
// kernel: tpu_custom_call.1
$region0: #{tpu_custom_call.1}
  #allocation0 [shape = 'u32[]', space=smem, size = 0x4, offset = 0x4, fixed_abs, tag = 'smem constant byte address 0x4 - core index']
  #allocation1 [shape = 'u32[72,128]{1,0:T(1,128)}', space=vmem, size = 0x9000, scoped, tag = 'internal scratch']
  %s0 = inlined_call_operand.hbm [shape: f32[4], index: 0, kind: input, shape index: {}]
  %s1 = inlined_call_operand.hbm [shape: f32[64,128], index: 1, kind: input, shape index: {}]
  %s2 = inlined_call_operand.hbm [shape: f32[64,128], index: 2, kind: input, shape index: {}]
  %s3 = inlined_call_operand.hbm [shape: f32[64,128], index: 3, kind: input, shape index: {}]
  %s4 = inlined_call_operand.hbm [shape: f32[64,128], index: 4, kind: input, shape index: {}]
  %s5 = inlined_call_operand.hbm [shape: f32[64,128], index: 5, kind: output, shape index: {}]
  %s6 = sld [smem:[#allocation0]]
  $region50: #{tpu_custom_call.1} parent=0
    _
  %s8 = ssub.s32 1, %s6
  %s9 = scalar_select 0, %s8, %s6
  $region1: #{tpu_custom_call.1} parent=0
    #allocation2 [shape = 'u8[512]{0}', space=smem, size = 0x200, scoped, tag = 'input window, operand 0, single buffered']
    #allocation3 [shape = 's32[1]{0}', space=sflag, size = 0x4, scoped, tag = 'scoped memory for tpu_custom_call.1']
    #allocation4 [shape = 's32[1]{0}', space=sflag, size = 0x4, scoped, tag = 'scoped memory for tpu_custom_call.1']
    #allocation5 [shape = 's32[1]{0}', space=sflag, size = 0x4, scoped, tag = 'scoped memory for tpu_custom_call.1']
    #allocation6 [shape = 'u8[32768]{0}', space=vmem, size = 0x8000, scoped, tag = 'input window, operand 1, single buffered']
    #allocation7 [shape = 'u8[32768]{0}', space=vmem, size = 0x8000, scoped, tag = 'input window, operand 2, single buffered']
    #allocation8 [shape = 's32[1]{0}', space=sflag, size = 0x4, scoped, tag = 'scoped memory for tpu_custom_call.1']
    #allocation9 [shape = 'u8[32768]{0}', space=vmem, size = 0x8000, scoped, tag = 'input window, operand 3, single buffered']
    #allocation10 [shape = 'u8[32768]{0}', space=vmem, size = 0x8000, scoped, tag = 'input window, operand 4, single buffered']
    #allocation11 [shape = 's32[1]{0}', space=sflag, size = 0x4, scoped, tag = 'scoped memory for tpu_custom_call.1']
    #allocation12 [shape = 'u8[32768]{0}', space=vmem, size = 0x8000, scoped, tag = 'output window, operand 0, single buffered']
    %10 = vsyncpa [#allocation5], 0
    %11 = vsyncpa [#allocation3], 0
    %12 = vsyncpa [#allocation8], 0
    %13 = vsyncpa [#allocation11], 0
    %14 = vsyncpa [#allocation4], 0
    // Predicated region
    $region2: #{tpu_custom_call.1} parent=1 // pred_check
      _
    $region3: #{tpu_custom_call.1} parent=1 // pred_check_branch
      %16 = sbr.rel (0) target = $region5
    $region4: #{tpu_custom_call.1} parent=1 // pred_region
      %18 = vsyncadd [#allocation5], 0
      %s20 = sshll.u32 %s0, 4
      %s21 = int_to_ptr.hbm [resolvable:$true] %s20
      %23 = dma.hbm_to_smem %s21, 16, [#allocation2], [#allocation5]
    $region5: #{tpu_custom_call.1} parent=1 // pred_fallthru
      _
    // Predicated region
    $region6: #{tpu_custom_call.1} parent=1 // pred_check
      _
    $region7: #{tpu_custom_call.1} parent=1 // pred_check_branch
      %25 = sbr.rel (0) target = $region9
    $region8: #{tpu_custom_call.1} parent=1 // pred_region
      %27 = vsyncadd [#allocation3], 0
      %s28 = sshll.u32 %s1, 4
      %s29 = int_to_ptr.hbm [resolvable:$true] %s28
      %s30 = sshll.u32 [#allocation6], 4
      %s31 = int_to_ptr.vmem [resolvable:$true] %s30
      %36 = dma.hbm_to_vmem [thread:$0]  %s29, 1024, %s31, [#allocation3], 128, 128, 8
    $region9: #{tpu_custom_call.1} parent=1 // pred_fallthru
      _
    // Predicated region
    $region10: #{tpu_custom_call.1} parent=1 // pred_check
      _
    $region11: #{tpu_custom_call.1} parent=1 // pred_check_branch
      %38 = sbr.rel (0) target = $region13
    $region12: #{tpu_custom_call.1} parent=1 // pred_region
      %40 = vsyncadd [#allocation8], 0
      %s41 = sshll.u32 %s2, 4
      %s42 = int_to_ptr.hbm [resolvable:$true] %s41
      %s43 = sshll.u32 [#allocation7], 4
      %s44 = int_to_ptr.vmem [resolvable:$true] %s43
      %49 = dma.hbm_to_vmem [thread:$0]  %s42, 1024, %s44, [#allocation8], 128, 128, 8
    $region13: #{tpu_custom_call.1} parent=1 // pred_fallthru
      _
    // Predicated region
    $region14: #{tpu_custom_call.1} parent=1 // pred_check
      _
    $region15: #{tpu_custom_call.1} parent=1 // pred_check_branch
      %51 = sbr.rel (0) target = $region17
    $region16: #{tpu_custom_call.1} parent=1 // pred_region
      %53 = vsyncadd [#allocation8], 0
      %s54 = sshll.u32 %s3, 4
      %s55 = int_to_ptr.hbm [resolvable:$true] %s54
      %s56 = sshll.u32 [#allocation9], 4
      %s57 = int_to_ptr.vmem [resolvable:$true] %s56
      %62 = dma.hbm_to_vmem [thread:$0]  %s55, 1024, %s57, [#allocation8], 128, 128, 8
    $region17: #{tpu_custom_call.1} parent=1 // pred_fallthru
      _
    // Predicated region
    $region18: #{tpu_custom_call.1} parent=1 // pred_check
      _
    $region19: #{tpu_custom_call.1} parent=1 // pred_check_branch
      %64 = sbr.rel (0) target = $region21
    $region20: #{tpu_custom_call.1} parent=1 // pred_region
      %66 = vsyncadd [#allocation11], 0
      %s67 = sshll.u32 %s4, 4
      %s68 = int_to_ptr.hbm [resolvable:$true] %s67
      %s69 = sshll.u32 [#allocation10], 4
      %s70 = int_to_ptr.vmem [resolvable:$true] %s69
      %75 = dma.hbm_to_vmem [thread:$0]  %s68, 1024, %s70, [#allocation11], 128, 128, 8
    $region21: #{tpu_custom_call.1} parent=1 // pred_fallthru
      _
    // Predicated region
    $region22: #{tpu_custom_call.1} parent=1 // pred_check
      _
    $region23: #{tpu_custom_call.1} parent=1 // pred_check_branch
      %77 = sbr.rel (0) target = $region25
    $region24: #{tpu_custom_call.1} parent=1 // pred_region
      %79 = dma.done [#allocation5], 16
    $region25: #{tpu_custom_call.1} parent=1 // pred_fallthru
      _
    // Predicated region
    $region26: #{tpu_custom_call.1} parent=1 // pred_check
      _
    $region27: #{tpu_custom_call.1} parent=1 // pred_check_branch
      %81 = sbr.rel (0) target = $region29
    $region28: #{tpu_custom_call.1} parent=1 // pred_region
      %83 = dma.done [#allocation3], 1024
    $region29: #{tpu_custom_call.1} parent=1 // pred_fallthru
      _
    // Predicated region
    $region30: #{tpu_custom_call.1} parent=1 // pred_check
      _
    $region31: #{tpu_custom_call.1} parent=1 // pred_check_branch
      %85 = sbr.rel (0) target = $region33
    $region32: #{tpu_custom_call.1} parent=1 // pred_region
      %87 = dma.done [#allocation8], 1024
    $region33: #{tpu_custom_call.1} parent=1 // pred_fallthru
      _
    // Predicated region
    $region34: #{tpu_custom_call.1} parent=1 // pred_check
      _
    $region35: #{tpu_custom_call.1} parent=1 // pred_check_branch
      %89 = sbr.rel (0) target = $region37
    $region36: #{tpu_custom_call.1} parent=1 // pred_region
      %91 = dma.done [#allocation8], 1024
    $region37: #{tpu_custom_call.1} parent=1 // pred_fallthru
      _
    // Predicated region
    $region38: #{tpu_custom_call.1} parent=1 // pred_check
      _
    $region39: #{tpu_custom_call.1} parent=1 // pred_check_branch
      %93 = sbr.rel (0) target = $region41
    $region40: #{tpu_custom_call.1} parent=1 // pred_region
      %95 = dma.done [#allocation11], 1024
    $region41: #{tpu_custom_call.1} parent=1 // pred_fallthru
      _
    %96 = sfence
    %v97 = vld [vmem:[#allocation6] sm:$0xff]
    %v98 = vld [vmem:[#allocation6 + $0x8] sm:$0xff]
    %v99 = vld [vmem:[#allocation6 + $0x10] sm:$0xff]
    %v100 = vld [vmem:[#allocation6 + $0x18] sm:$0xff]
    %v101 = vld [vmem:[#allocation6 + $0x20] sm:$0xff]
    %v102 = vld [vmem:[#allocation6 + $0x28] sm:$0xff]
    %v103 = vld [vmem:[#allocation6 + $0x30] sm:$0xff]
    %v104 = vld [vmem:[#allocation6 + $0x38] sm:$0xff]
    %s105 = sld [smem:[#allocation2]]
    %v106 = vstv %s105
    %v107 = vmul.f32 %v97, %v106
    %v108 = vmul.f32 %v98, %v106
    %v109 = vmul.f32 %v99, %v106
    %v110 = vmul.f32 %v100, %v106
    %v111 = vmul.f32 %v101, %v106
    %v112 = vmul.f32 %v102, %v106
    %v113 = vmul.f32 %v103, %v106
    %v114 = vmul.f32 %v104, %v106
    %v115 = vld [vmem:[#allocation7] sm:$0xff]
    %v116 = vld [vmem:[#allocation7 + $0x8] sm:$0xff]
    %v117 = vld [vmem:[#allocation7 + $0x10] sm:$0xff]
    %v118 = vld [vmem:[#allocation7 + $0x18] sm:$0xff]
    %v119 = vld [vmem:[#allocation7 + $0x20] sm:$0xff]
    %v120 = vld [vmem:[#allocation7 + $0x28] sm:$0xff]
    %v121 = vld [vmem:[#allocation7 + $0x30] sm:$0xff]
    %v122 = vld [vmem:[#allocation7 + $0x38] sm:$0xff]
    %s123 = sld [smem:[#allocation2 + $0x1]]
    %v124 = vstv %s123
    %v125 = vmul.f32 %v115, %v124
    %v126 = vmul.f32 %v116, %v124
    %v127 = vmul.f32 %v117, %v124
    %v128 = vmul.f32 %v118, %v124
    %v129 = vmul.f32 %v119, %v124
    %v130 = vmul.f32 %v120, %v124
    %v131 = vmul.f32 %v121, %v124
    %v132 = vmul.f32 %v122, %v124
    %v133 = vadd.f32 %v107, %v125
    %v134 = vadd.f32 %v108, %v126
    %v135 = vadd.f32 %v109, %v127
    %v136 = vadd.f32 %v110, %v128
    %v137 = vadd.f32 %v111, %v129
    %v138 = vadd.f32 %v112, %v130
    %v139 = vadd.f32 %v113, %v131
    %v140 = vadd.f32 %v114, %v132
    %v141 = vld [vmem:[#allocation9] sm:$0xff]
    %v142 = vld [vmem:[#allocation9 + $0x8] sm:$0xff]
    %v143 = vld [vmem:[#allocation9 + $0x10] sm:$0xff]
    %v144 = vld [vmem:[#allocation9 + $0x18] sm:$0xff]
    %v145 = vld [vmem:[#allocation9 + $0x20] sm:$0xff]
    %v146 = vld [vmem:[#allocation9 + $0x28] sm:$0xff]
    %v147 = vld [vmem:[#allocation9 + $0x30] sm:$0xff]
    %v148 = vld [vmem:[#allocation9 + $0x38] sm:$0xff]
    %s149 = sld [smem:[#allocation2 + $0x2]]
    %v150 = vstv %s149
    %v151 = vmul.f32 %v141, %v150
    %v152 = vmul.f32 %v142, %v150
    %v153 = vmul.f32 %v143, %v150
    %v154 = vmul.f32 %v144, %v150
    %v155 = vmul.f32 %v145, %v150
    %v156 = vmul.f32 %v146, %v150
    %v157 = vmul.f32 %v147, %v150
    %v158 = vmul.f32 %v148, %v150
    %v159 = vadd.f32 %v133, %v151
    %v160 = vadd.f32 %v134, %v152
    %v161 = vadd.f32 %v135, %v153
    %v162 = vadd.f32 %v136, %v154
    %v163 = vadd.f32 %v137, %v155
    %v164 = vadd.f32 %v138, %v156
    %v165 = vadd.f32 %v139, %v157
    %v166 = vadd.f32 %v140, %v158
    %v167 = vld [vmem:[#allocation10] sm:$0xff]
    %v168 = vld [vmem:[#allocation10 + $0x8] sm:$0xff]
    %v169 = vld [vmem:[#allocation10 + $0x10] sm:$0xff]
    %v170 = vld [vmem:[#allocation10 + $0x18] sm:$0xff]
    %v171 = vld [vmem:[#allocation10 + $0x20] sm:$0xff]
    %v172 = vld [vmem:[#allocation10 + $0x28] sm:$0xff]
    %v173 = vld [vmem:[#allocation10 + $0x30] sm:$0xff]
    %v174 = vld [vmem:[#allocation10 + $0x38] sm:$0xff]
    %s175 = sld [smem:[#allocation2 + $0x3]]
    %v176 = vstv %s175
    %v177 = vmul.f32 %v167, %v176
    %v178 = vmul.f32 %v168, %v176
    %v179 = vmul.f32 %v169, %v176
    %v180 = vmul.f32 %v170, %v176
    %v181 = vmul.f32 %v171, %v176
    %v182 = vmul.f32 %v172, %v176
    %v183 = vmul.f32 %v173, %v176
    %v184 = vmul.f32 %v174, %v176
    %v185 = vadd.f32 %v159, %v177
    %v186 = vadd.f32 %v160, %v178
    %v187 = vadd.f32 %v161, %v179
    %v188 = vadd.f32 %v162, %v180
    %v189 = vadd.f32 %v163, %v181
    %v190 = vadd.f32 %v164, %v182
    %v191 = vadd.f32 %v165, %v183
    %v192 = vadd.f32 %v166, %v184
    %193 = vst [vmem:[#allocation12] sm:$0xff] %v185
    %194 = vst [vmem:[#allocation12 + $0x8] sm:$0xff] %v186
    %195 = vst [vmem:[#allocation12 + $0x10] sm:$0xff] %v187
    %196 = vst [vmem:[#allocation12 + $0x18] sm:$0xff] %v188
    %197 = vst [vmem:[#allocation12 + $0x20] sm:$0xff] %v189
    %198 = vst [vmem:[#allocation12 + $0x28] sm:$0xff] %v190
    %199 = vst [vmem:[#allocation12 + $0x30] sm:$0xff] %v191
    %200 = vst [vmem:[#allocation12 + $0x38] sm:$0xff] %v192
    // Predicated region
    $region42: #{tpu_custom_call.1} parent=1 // pred_check
      _
    $region43: #{tpu_custom_call.1} parent=1 // pred_check_branch
      %202 = sbr.rel (0) target = $region45
    $region44: #{tpu_custom_call.1} parent=1 // pred_region
      %204 = vsyncadd [#allocation4], 0
      %s205 = sshll.u32 [#allocation12], 4
      %s206 = int_to_ptr.vmem [resolvable:$true] %s205
      %s207 = sshll.u32 %s5, 4
      %s208 = int_to_ptr.hbm [resolvable:$true] %s207
      %213 = dma.vmem_to_hbm [thread:$0]  %s206, 1024, %s208, [#allocation4], 128, 128, 8
    $region45: #{tpu_custom_call.1} parent=1 // pred_fallthru
      _
    // Predicated region
    $region46: #{tpu_custom_call.1} parent=1 // pred_check
      _
    $region47: #{tpu_custom_call.1} parent=1 // pred_check_branch
      %215 = sbr.rel (0) target = $region49
    $region48: #{tpu_custom_call.1} parent=1 // pred_region
      %217 = dma.done [#allocation4], 1024
    $region49: #{tpu_custom_call.1} parent=1 // pred_fallthru
      _
    %218 = vsyncpa [#allocation3], 1
    %219 = vsyncpa [#allocation8], 1
    %220 = vsyncpa [#allocation11], 1
    %221 = vsyncpa [#allocation4], 1
    %222 = vsyncpa [#allocation5], 1

</llo_original>
